<compile_context>
chip_gen: v7x
topology: tpu7x:2x2x1
jax: 0.10.0
libtpu: 0.0.40
codegen_flags: <defaults>
</compile_context>

<pallas_src>
import functools
import math

import jax
import jax.numpy as jnp
from jax.experimental import pallas as pl
from jax.experimental.pallas import tpu as pltpu


def _patch_embed_kernel(x_ref, w_ref, pos_ref, o_ref, *, bb, n):
    # x_ref:   [R, Din_p]   R = bb*N patch rows (bb images per grid step)
    # w_ref:   [Din_p, E_p] projection weight (transposed vs torch layout)
    # pos_ref: [N, E_p]     pos_embedding + bias (f32), shared by all bb images
    # o_ref:   [R, E_p]
    y = jnp.dot(x_ref[...], w_ref[...], preferred_element_type=jnp.float32)
    pos = pos_ref[...]
    if bb == 1:
        o_ref[...] = (y + pos).astype(o_ref.dtype)
    else:
        # Broadcast the [N, E] positional block across the bb images of this
        # step with an unrolled add over static row chunks (no reshape).
        for j in range(bb):
            sl = slice(j * n, (j + 1) * n)
            o_ref[sl, :] = (y[sl, :] + pos).astype(o_ref.dtype)


def _round_up(x, m):
    return ((x + m - 1) // m) * m


def _vmem_capacity_bytes():
    try:
        return int(pltpu.get_tpu_info().vmem_capacity_bytes)
    except Exception:
        return 64 * 1024 * 1024        # conservative (v7x-sized) fallback


def _const_block_spec(shape):
    idx = lambda i: (0, 0)
    try:
        # Constant index map -> single-buffering halves its VMEM footprint.
        return pl.BlockSpec(shape, idx, pipeline_mode=pl.Buffered(1))
    except Exception:
        return pl.BlockSpec(shape, idx)


def patch_embedding(x, weight, bias, pos_embedding, patch_size, *,
                    compute_dtype=jnp.bfloat16, out_dtype=None,
                    rows_target=None, vmem_budget_bytes=None,
                    fuse_patchify=True):
    """
    x:             [B, C, H, W]  (NCHW, matching the PyTorch module)
    weight:        [E, C*p*p]    (torch nn.Linear weight layout)
    bias:          [E]
    pos_embedding: [1, N, E]
    returns:       [B, N, E]
    """
    B, C, H, W = x.shape
    p = patch_size
    assert H % p == 0 and W % p == 0
    nh, nw = H // p, W // p
    N = nh * nw
    E = weight.shape[0]
    Din = C * p * p
    if out_dtype is None:
        out_dtype = x.dtype

    if compute_dtype is not None:       # bf16 by default: native MXU operands
        x = x.astype(compute_dtype)
        weight = weight.astype(compute_dtype)

    # ---- patchify: identical element ordering to torch unfold/unfold/permute.
    xp = x.reshape(B, C, nh, p, nw, p)
    xp = jnp.transpose(xp, (0, 2, 4, 1, 3, 5))
    xp = xp.reshape(B * N, Din)

    # ---- pad lane dims to multiples of 128 (zero-pad => numerically exact;
    # no-op for standard ViT sizes where Din/E are already multiples of 128).
    Din_p = _round_up(Din, 128)
    E_p = _round_up(E, 128)
    w_t = weight.T                      # [Din, E]
    if Din_p != Din:
        xp = jnp.pad(xp, ((0, 0), (0, Din_p - Din)))
        w_t = jnp.pad(w_t, ((0, Din_p - Din), (0, 0)))
    if E_p != E:
        w_t = jnp.pad(w_t, ((0, 0), (0, E_p - E)))

    # ---- fold bias into the positional embedding -> one f32 add in kernel.
    pos_b = (pos_embedding.reshape(N, E).astype(jnp.float32)
             + bias.astype(jnp.float32)[None, :])
    if E_p != E:
        pos_b = jnp.pad(pos_b, ((0, 0), (0, E_p - E)))

    # ---- per-generation block sizing.
    cap = _vmem_capacity_bytes()
    if vmem_budget_bytes is None:
        # >=16 MiB headroom for Mosaic scratch/semaphores; ~100 MiB on 128 MiB
        # parts (v5e/v6e), ~48 MiB on 64 MiB parts (v7x).
        vmem_budget_bytes = max(32 * 1024 * 1024,
                                min(cap - 16 * 1024 * 1024, 100 * 1024 * 1024))
    if rows_target is None:
        rows_target = 2048 if cap >= 96 * 1024 * 1024 else 1024

    isz = jnp.dtype(xp.dtype).itemsize
    osz = jnp.dtype(out_dtype).itemsize
    # dtype-aware sublane packing: 8 rows f32, 16 bf16, 32 int8/fp8.
    sub = max(32 // isz, 32 // osz, 8)
    mult = sub // math.gcd(N, sub)      # smallest bb with (bb*N) % sub == 0

    bb = max(1, rows_target // N)
    bb = max(mult, (bb // mult) * mult)
    bb = min(bb, _round_up(B, mult))    # don't pad far past the real batch
    if B > mult:
        # Keep >=2 grid steps: megacore sharding (v7x) + DMA/compute overlap.
        half = max(mult, (((B + 1) // 2) // mult) * mult)
        bb = min(bb, half)

    def vmem_need(bb_):
        r = bb_ * N
        return (2 * r * Din_p * isz     # x block, double-buffered
                + 2 * r * E_p * osz     # out block, double-buffered
                + Din_p * E_p * isz     # weight, single-buffered (constant)
                + N * E_p * 4)          # pos+bias, single-buffered (constant)

    while bb > mult and vmem_need(bb) > vmem_budget_bytes:
        bb -= mult

    B_pad = _round_up(B, bb)
    if B_pad != B:
        xp = jnp.pad(xp, ((0, (B_pad - B) * N), (0, 0)))

    R = bb * N
    grid = (B_pad // bb,)

    vmem_limit = int(min(max(32 * 1024 * 1024, vmem_need(bb) + 4 * 1024 * 1024),
                         max(cap - 8 * 1024 * 1024,
                             vmem_need(bb) + 2 * 1024 * 1024)))

    kernel = functools.partial(_patch_embed_kernel, bb=bb, n=N)

    out_flat = pl.pallas_call(
        kernel,
        out_shape=jax.ShapeDtypeStruct((B_pad * N, E_p), out_dtype),
        grid_spec=pltpu.PrefetchScalarGridSpec(
            num_scalar_prefetch=0,
            grid=grid,
            in_specs=[
                pl.BlockSpec((R, Din_p), lambda i: (i, 0)),   # patches
                _const_block_spec((Din_p, E_p)),              # weight (const)
                _const_block_spec((N, E_p)),                  # pos+bias (const)
            ],
            out_specs=pl.BlockSpec((R, E_p), lambda i: (i, 0)),
        ),
        compiler_params=pltpu.CompilerParams(
            dimension_semantics=("parallel",),
            # Fuse the patchify reshape/transpose into the input DMA; set
            # fuse_patchify=False to A/B against a materialized [B*N, Din].
            allow_input_fusion=[bool(fuse_patchify), False, False],
            vmem_limit_bytes=vmem_limit,
        ),
    )(xp, w_t, pos_b)

    out = out_flat.reshape(B_pad, N, E_p)[:B, :, :E]
    return out


def reference(x, weight, bias, pos_embedding, patch_size):
    """Pure-JAX reference mirroring the torch forward."""
    B, C, H, W = x.shape
    p = patch_size
    nh, nw = H // p, W // p
    N = nh * nw
    xp = x.reshape(B, C, nh, p, nw, p)
    xp = jnp.transpose(xp, (0, 2, 4, 1, 3, 5)).reshape(B, N, C * p * p)
    y = xp @ weight.T + bias
    return y + pos_embedding


if __name__ == "__main__":
    # Small shapes consistent with the module (num_classes=0 -> no cls token).
    img_size, patch_size, in_channels, embed_dim = 16, 4, 4, 32
    batch = 2
    num_patches = (img_size // patch_size) ** 2        # 16
    patch_dim = patch_size ** 2 * in_channels          # 64

    key = jax.random.PRNGKey(0)
    kx, kw, kb, kp = jax.random.split(key, 4)
    x = jax.random.normal(kx, (batch, in_channels, img_size, img_size), jnp.float32)
    weight = jax.random.normal(kw, (embed_dim, patch_dim), jnp.float32) * 0.02
    bias = jax.random.normal(kb, (embed_dim,), jnp.float32) * 0.02
    pos_embedding = jax.random.normal(kp, (1, num_patches, embed_dim), jnp.float32)

    ref = reference(x, weight, bias, pos_embedding, patch_size)

    # Exact path (f32 MXU operands) -- tight tolerance.
    out_f32 = jax.block_until_ready(
        patch_embedding(x, weight, bias, pos_embedding, patch_size,
                        compute_dtype=jnp.float32))
    assert out_f32.shape == (batch, num_patches, embed_dim), out_f32.shape
    err_f32 = float(jnp.max(jnp.abs(out_f32 - ref)))
    assert jnp.allclose(out_f32, ref, atol=1e-5, rtol=1e-5), err_f32

    # Default path (bf16 MXU operands, f32 accumulation) -- bf16 tolerance.
    out_bf16 = jax.block_until_ready(
        patch_embedding(x, weight, bias, pos_embedding, patch_size))
    assert out_bf16.shape == (batch, num_patches, embed_dim), out_bf16.shape
    err_bf16 = float(jnp.max(jnp.abs(out_bf16 - ref)))
    assert jnp.allclose(out_bf16, ref, atol=3e-2, rtol=3e-2), err_bf16

    print("KERNEL_OK")
</pallas_src>

<mosaic_0001>
module attributes {stable_mosaic.version = 11 : i64} {
  func.func @_patch_embed_kernel(%arg0: i32, %arg1: memref<16x128xf32, #tpu.memory_space<vmem>>, %arg2: memref<128x128xf32, #tpu.memory_space<vmem>>, %arg3: memref<16x128xf32, #tpu.memory_space<vmem>>, %arg4: memref<16x128xf32, #tpu.memory_space<vmem>>) attributes {dimension_semantics = [#tpu.dimension_semantics<parallel>], iteration_bounds = array<i64: 2>, scalar_prefetch = 0 : i64, scratch_operands = 0 : i64, tpu.core_type = #tpu.core_type<tc>, window_params = [{transform_indices = @transform_0, window_bounds = array<i64: 16, 128>}, {pipeline_mode = #tpu.pipeline_mode<synchronous>, transform_indices = @transform_1, window_bounds = array<i64: 128, 128>}, {pipeline_mode = #tpu.pipeline_mode<synchronous>, transform_indices = @transform_2, window_bounds = array<i64: 16, 128>}, {transform_indices = @transform_3, window_bounds = array<i64: 16, 128>}]} {
    %c0 = arith.constant 0 : index
    %c0_0 = arith.constant 0 : index
    %0 = vector.load %arg1[%c0, %c0_0] : memref<16x128xf32, #tpu.memory_space<vmem>>, vector<16x128xf32>
    %c0_1 = arith.constant 0 : index
    %c0_2 = arith.constant 0 : index
    %1 = vector.load %arg2[%c0_1, %c0_2] : memref<128x128xf32, #tpu.memory_space<vmem>>, vector<128x128xf32>
    %cst = arith.constant dense<0.000000e+00> : vector<16x128xf32>
    %2 = tpu.matmul %0, %1, %cst {dimension_numbers = #tpu.dot_dimension_numbers<[1], [0], [0], [1], [0, 0, 1, 1], [], []>} : vector<16x128xf32>, vector<128x128xf32>, vector<16x128xf32> -> vector<16x128xf32>
    %c0_3 = arith.constant 0 : index
    %c0_4 = arith.constant 0 : index
    %3 = vector.load %arg3[%c0_3, %c0_4] : memref<16x128xf32, #tpu.memory_space<vmem>>, vector<16x128xf32>
    %4 = arith.addf %2, %3 : vector<16x128xf32>
    %c0_5 = arith.constant 0 : index
    %c0_6 = arith.constant 0 : index
    %5 = vector.load %arg4[%c0_5, %c0_6] : memref<16x128xf32, #tpu.memory_space<vmem>>, vector<16x128xf32>
    tpu.vector_store %arg4[%c0_5, %c0_6], %4 {strides = array<i32>} : memref<16x128xf32, #tpu.memory_space<vmem>>, vector<16x128xf32>,
    return
  }
  func.func @transform_0(%arg0: i32) -> (i32, i32) {
    %c0_i32 = arith.constant 0 : i32
    %c0_i32_0 = arith.constant 0 : i32
    return %arg0, %c0_i32 : i32, i32
  }
  func.func @transform_1(%arg0: i32) -> (i32, i32) {
    %c0_i32 = arith.constant 0 : i32
    %c0_i32_0 = arith.constant 0 : i32
    %c0_i32_1 = arith.constant 0 : i32
    return %c0_i32, %c0_i32_0 : i32, i32
  }
  func.func @transform_2(%arg0: i32) -> (i32, i32) {
    %c0_i32 = arith.constant 0 : i32
    %c0_i32_0 = arith.constant 0 : i32
    %c0_i32_1 = arith.constant 0 : i32
    return %c0_i32, %c0_i32_0 : i32, i32
  }
  func.func @transform_3(%arg0: i32) -> (i32, i32) {
    %c0_i32 = arith.constant 0 : i32
    %c0_i32_0 = arith.constant 0 : i32
    return %arg0, %c0_i32 : i32, i32
  }
}

</mosaic_0001>

<llo_original>
// kernel: tpu_custom_call.1
$region0: #{tpu_custom_call.1}
  #allocation0 [shape = 'u32[]', space=smem, size = 0x4, offset = 0x4, fixed_abs, tag = 'smem constant byte address 0x4 - core index']
  #allocation1 [shape = 'u32[144,128]{1,0:T(1,128)}', space=vmem, size = 0x12000, scoped, tag = 'internal scratch']
  %s0 = inlined_call_operand.hbm [shape: f32[32,128], index: 0, kind: input, shape index: {}]
  %s1 = inlined_call_operand.hbm [shape: f32[128,128], index: 1, kind: input, shape index: {}]
  %s2 = inlined_call_operand.hbm [shape: f32[16,128], index: 2, kind: input, shape index: {}]
  %s3 = inlined_call_operand.hbm [shape: f32[32,128], index: 3, kind: output, shape index: {}]
  %s4 = sld [smem:[#allocation0]]
  $region57: #{tpu_custom_call.1} parent=0
    _
  %s6 = ssub.s32 1, %s4
  %s7 = scalar_select 0, %s6, %s4
  $region1: #{tpu_custom_call.1} parent=0
    #allocation2 [shape = 'u8[16384]{0}', space=vmem, size = 0x4000, scoped, tag = 'input window, operand 0']
    #allocation3 [shape = 's32[2]{0}', space=sflag, size = 0x8, scoped, tag = 'scoped memory for tpu_custom_call.1']
    #allocation4 [shape = 's32[2]{0}', space=sflag, size = 0x8, scoped, tag = 'scoped memory for tpu_custom_call.1']
    #allocation5 [shape = 'u8[65536]{0}', space=vmem, size = 0x10000, scoped, tag = 'input window, operand 1, single buffered']
    #allocation6 [shape = 's32[1]{0}', space=sflag, size = 0x4, scoped, tag = 'scoped memory for tpu_custom_call.1']
    #allocation7 [shape = 'u8[8192]{0}', space=vmem, size = 0x2000, scoped, tag = 'input window, operand 2, single buffered']
    #allocation8 [shape = 'u8[16384]{0}', space=vmem, size = 0x4000, scoped, tag = 'output window, operand 0']
    %8 = vsyncpa [#allocation3], 0
    %s9 = scalar_lea.sflag [#allocation3], 1
    %10 = vsyncpa %s9, 0
    %11 = vsyncpa [#allocation6], 0
    %12 = vsyncpa [#allocation4], 0
    %s13 = scalar_lea.sflag [#allocation4], 1
    %14 = vsyncpa %s13, 0
    loop: start=0, step=1, limit=4
    $region2: #{tpu_custom_call.1} parent=1 // loop_pre_header
      _
    $region3: #{tpu_custom_call.1} parent=1 // loop_header
      %s16 = sphi 0, %s20
      %p17 = scmp.ge.s32.totalorder %s16, 4
      %s26 = sphi 0, %s28
      %s29 = sphi 0, %s26
      %s30 = sphi 0, %s29
      %s46 = sphi 0, %s30
      %s50 = sphi 0, %s50
      %s52 = sphi 0, %s50
      %s53 = sphi 0, %s52
      %s67 = sphi 0, %s53
      %s71 = sphi 0, %s71
      %s73 = sphi 0, %s71
      %s74 = sphi 0, %s73
      %s88 = sphi 0, %s74
      %s94 = sphi 0, %s96
      %s97 = sphi 0, %s94
      %s98 = sphi 0, %s97
      %s114 = sphi 0, %s98
    $region4: #{tpu_custom_call.1} parent=1 // loop_header_branch
      %19 = sbr.rel (%p17) target = $region8
    $region5: #{tpu_custom_call.1} parent=1 // loop_body
      %s21 = ssub.s32 %s16, 1
      %s22 = ssub.s32 %s16, 2
      %s23 = sadd.s32 %s16, 1
      %s24 = ssub.s32 %s16, %s23
      %p25 = scmp.eq.s32.totalorder %s24, 0
      %s27 = sadd.s32 %s26, 1
      %s28 = scalar_select %p25, %s26, %s27
      %p31 = pneg %p25
      %p32 = scmp.eq.s32.totalorder %s16, 1
      %p33 = por %p31, %p32
      %p34 = scmp.ne.s32.totalorder %s26, %s29
      %p35 = scmp.eq.s32.totalorder %s16, 0
      %p36 = por %p34, %p35
      %p37 = scmp.ne.s32.totalorder %s26, %s29
      %p38 = scmp.eq.s32.totalorder %s21, 1
      %p39 = por %p37, %p38
      %p40 = scmp.ne.s32.totalorder %s29, %s30
      %p41 = scmp.eq.s32.totalorder %s21, 0
      %p42 = por %p40, %p41
      %p43 = scmp.ne.s32.totalorder %s29, %s30
      %p44 = scmp.eq.s32.totalorder %s22, 1
      %p45 = por %p43, %p44
      %p47 = scmp.ne.s32.totalorder %s30, %s46
      %p48 = scmp.eq.s32.totalorder %s22, 0
      %p49 = por %p47, %p48
      %s51 = sadd.s32 %s50, 1
      %p54 = scmp.eq.s32.totalorder %s16, 1
      %p55 = scmp.ne.s32.totalorder %s50, %s52
      %p56 = scmp.eq.s32.totalorder %s16, 0
      %p57 = por %p55, %p56
      %p58 = scmp.ne.s32.totalorder %s50, %s52
      %p59 = scmp.eq.s32.totalorder %s21, 1
      %p60 = por %p58, %p59
      %p61 = scmp.ne.s32.totalorder %s52, %s53
      %p62 = scmp.eq.s32.totalorder %s21, 0
      %p63 = por %p61, %p62
      %p64 = scmp.ne.s32.totalorder %s52, %s53
      %p65 = scmp.eq.s32.totalorder %s22, 1
      %p66 = por %p64, %p65
      %p68 = scmp.ne.s32.totalorder %s53, %s67
      %p69 = scmp.eq.s32.totalorder %s22, 0
      %p70 = por %p68, %p69
      %s72 = sadd.s32 %s71, 1
      %p75 = scmp.eq.s32.totalorder %s16, 1
      %p76 = scmp.ne.s32.totalorder %s71, %s73
      %p77 = scmp.eq.s32.totalorder %s16, 0
      %p78 = por %p76, %p77
      %p79 = scmp.ne.s32.totalorder %s71, %s73
      %p80 = scmp.eq.s32.totalorder %s21, 1
      %p81 = por %p79, %p80
      %p82 = scmp.ne.s32.totalorder %s73, %s74
      %p83 = scmp.eq.s32.totalorder %s21, 0
      %p84 = por %p82, %p83
      %p85 = scmp.ne.s32.totalorder %s73, %s74
      %p86 = scmp.eq.s32.totalorder %s22, 1
      %p87 = por %p85, %p86
      %p89 = scmp.ne.s32.totalorder %s74, %s88
      %p90 = scmp.eq.s32.totalorder %s22, 0
      %p91 = por %p89, %p90
      %s92 = ssub.s32 %s16, %s23
      %p93 = scmp.eq.s32.totalorder %s92, 0
      %s95 = sadd.s32 %s94, 1
      %s96 = scalar_select %p93, %s94, %s95
      %p99 = pneg %p93
      %p100 = scmp.eq.s32.totalorder %s16, 1
      %p101 = por %p99, %p100
      %p102 = scmp.ne.s32.totalorder %s94, %s97
      %p103 = scmp.eq.s32.totalorder %s16, 0
      %p104 = por %p102, %p103
      %p105 = scmp.ne.s32.totalorder %s94, %s97
      %p106 = scmp.eq.s32.totalorder %s21, 1
      %p107 = por %p105, %p106
      %p108 = scmp.ne.s32.totalorder %s97, %s98
      %p109 = scmp.eq.s32.totalorder %s21, 0
      %p110 = por %p108, %p109
      %p111 = scmp.ne.s32.totalorder %s97, %s98
      %p112 = scmp.eq.s32.totalorder %s22, 1
      %p113 = por %p111, %p112
      %p115 = scmp.ne.s32.totalorder %s98, %s114
      %p116 = scmp.eq.s32.totalorder %s22, 0
      %p117 = por %p115, %p116
      %p118 = scmp.le.s32.totalorder 1, %s16
      %p119 = scmp.lt.s32.totalorder %s16, 3
      %p120 = pnand %p118, %p119
      %p121 = pneg %p120
      // Predicated region
      $region9: #{tpu_custom_call.1} parent=5 // pred_check
        _
      $region10: #{tpu_custom_call.1} parent=5 // pred_check_branch
        %123 = sbr.rel (%p120) target = $region12
      $region11: #{tpu_custom_call.1} parent=5 // pred_region
        %s124 = ssub.s32 %s16, 1
        // Predicated region
        $region13: #{tpu_custom_call.1} parent=11 // pred_check
          %p125 = pneg %p63
        $region14: #{tpu_custom_call.1} parent=11 // pred_check_branch
          %127 = sbr.rel (%p125) target = $region16
        $region15: #{tpu_custom_call.1} parent=11 // pred_region
          %s129 = ssub.s32 2048, 2048
          %130 = vsyncadd [#allocation6], %s129
          %s131 = sshll.u32 [#allocation5], 4
          %s132 = int_to_ptr.vmem [resolvable:$true] %s131
          %137 = dma.hbm_to_vmem [thread:$0]  %s1, 2048, %s132, [#allocation6], 128, 128, 8
        $region16: #{tpu_custom_call.1} parent=11 // pred_fallthru
          _
        // Predicated region
        $region17: #{tpu_custom_call.1} parent=11 // pred_check
          %p138 = pneg %p84
        $region18: #{tpu_custom_call.1} parent=11 // pred_check_branch
          %140 = sbr.rel (%p138) target = $region20
        $region19: #{tpu_custom_call.1} parent=11 // pred_region
          %s142 = ssub.s32 256, 256
          %143 = vsyncadd [#allocation6], %s142
          %s144 = sshll.u32 [#allocation7], 4
          %s145 = int_to_ptr.vmem [resolvable:$true] %s144
          %150 = dma.hbm_to_vmem [thread:$0]  %s2, 256, %s145, [#allocation6], 128, 128, 8
        $region20: #{tpu_custom_call.1} parent=11 // pred_fallthru
          _
      $region12: #{tpu_custom_call.1} parent=5 // pred_fallthru
        _
      %p151 = scmp.lt.s32.totalorder %s16, 2
      // Predicated region
      $region21: #{tpu_custom_call.1} parent=5 // pred_check
        %p152 = pneg %p151
      $region22: #{tpu_custom_call.1} parent=5 // pred_check_branch
        %154 = sbr.rel (%p152) target = $region24
      $region23: #{tpu_custom_call.1} parent=5 // pred_region
        // Predicated region
        $region25: #{tpu_custom_call.1} parent=23 // pred_check
          %p155 = pneg %p36
        $region26: #{tpu_custom_call.1} parent=23 // pred_check_branch
          %157 = sbr.rel (%p155) target = $region28
        $region27: #{tpu_custom_call.1} parent=23 // pred_region
          %s158 = sand.u32 %s26, 1
          %s159 = scalar_lea.sflag [#allocation3], %s158
          %s160 = sand.u32 %s26, 1
          %s161 = smul.addr %s160, 16
          %s162 = scalar_lea.vmem [#allocation2], %s161
          %s163 = smul.u32 2, %s16
          %s165 = ssub.s32 256, 256
          %166 = vsyncadd %s159, %s165
          %s167 = smul.addr %s163, 128
          %s168 = scalar_lea.hbm %s0, %s167
          %s169 = sshll.u32 %s162, 4
          %s170 = int_to_ptr.vmem [resolvable:$true] %s169
          %175 = dma.hbm_to_vmem [thread:$0]  %s168, 256, %s170, %s159, 128, 128, 8
        $region28: #{tpu_custom_call.1} parent=23 // pred_fallthru
          _
      $region24: #{tpu_custom_call.1} parent=5 // pred_fallthru
        _
      %p176 = scmp.le.s32.totalorder 1, %s16
      %p177 = scmp.lt.s32.totalorder %s16, 3
      %p178 = pnand %p176, %p177
      %p179 = pneg %p178
      // Predicated region
      $region29: #{tpu_custom_call.1} parent=5 // pred_check
        _
      $region30: #{tpu_custom_call.1} parent=5 // pred_check_branch
        %181 = sbr.rel (%p178) target = $region32
      $region31: #{tpu_custom_call.1} parent=5 // pred_region
        %s182 = ssub.s32 %s16, 1
        %s183 = sand.u32 %s29, 1
        %s184 = scalar_lea.sflag [#allocation3], %s183
        %s185 = sand.u32 %s29, 1
        %s186 = smul.addr %s185, 16
        %s187 = scalar_lea.vmem [#allocation2], %s186
        // Predicated region
        $region33: #{tpu_custom_call.1} parent=31 // pred_check
          %p188 = pneg %p42
        $region34: #{tpu_custom_call.1} parent=31 // pred_check_branch
          %190 = sbr.rel (%p188) target = $region36
        $region35: #{tpu_custom_call.1} parent=31 // pred_region
          %191 = dma.done %s184, 256
        $region36: #{tpu_custom_call.1} parent=31 // pred_fallthru
          _
        // Predicated region
        $region37: #{tpu_custom_call.1} parent=31 // pred_check
          %p192 = pneg %p63
        $region38: #{tpu_custom_call.1} parent=31 // pred_check_branch
          %194 = sbr.rel (%p192) target = $region40
        $region39: #{tpu_custom_call.1} parent=31 // pred_region
          %195 = dma.done [#allocation6], 2048
        $region40: #{tpu_custom_call.1} parent=31 // pred_fallthru
          _
        // Predicated region
        $region41: #{tpu_custom_call.1} parent=31 // pred_check
          %p196 = pneg %p84
        $region42: #{tpu_custom_call.1} parent=31 // pred_check_branch
          %198 = sbr.rel (%p196) target = $region44
        $region43: #{tpu_custom_call.1} parent=31 // pred_region
          %199 = dma.done [#allocation6], 256
        $region44: #{tpu_custom_call.1} parent=31 // pred_fallthru
          _
        %s200 = sand.u32 %s29, 1
        %s201 = scalar_lea.sflag [#allocation3], %s200
        %s202 = sand.u32 %s29, 1
        %s203 = smul.addr %s202, 16
        %s204 = scalar_lea.vmem [#allocation2], %s203
        %p205 = pneg %p42
        %p206 = pneg %p39
        %p207 = pneg %p63
        %p208 = pneg %p60
        %p209 = pneg %p84
        %p210 = pneg %p81
        %p211 = pneg %p110
        %p212 = pneg %p107
        %s213 = sand.u32 %s97, 1
        %s214 = scalar_lea.sflag [#allocation4], %s213
        %s215 = sand.u32 %s97, 1
        %s216 = smul.addr %s215, 16
        %s217 = scalar_lea.vmem [#allocation8], %s216
        %s218 = smul.u32 2, %s21
        %s219 = smul.u32 2, %s21
        %v220 = vld [vmem:[%s187] sm:$0xff]
        %v221 = vld [vmem:[%s187 + $0x8] sm:$0xff]
        %v222 = vld [vmem:[#allocation5] sm:$0xff]
        %v223 = vld [vmem:[#allocation5 + $0x8] sm:$0xff]
        %v224 = vld [vmem:[#allocation5 + $0x10] sm:$0xff]
        %v225 = vld [vmem:[#allocation5 + $0x18] sm:$0xff]
        %v226 = vld [vmem:[#allocation5 + $0x20] sm:$0xff]
        %v227 = vld [vmem:[#allocation5 + $0x28] sm:$0xff]
        %v228 = vld [vmem:[#allocation5 + $0x30] sm:$0xff]
        %v229 = vld [vmem:[#allocation5 + $0x38] sm:$0xff]
        %v230 = vld [vmem:[#allocation5 + $0x40] sm:$0xff]
        %v231 = vld [vmem:[#allocation5 + $0x48] sm:$0xff]
        %v232 = vld [vmem:[#allocation5 + $0x50] sm:$0xff]
        %v233 = vld [vmem:[#allocation5 + $0x58] sm:$0xff]
        %v234 = vld [vmem:[#allocation5 + $0x60] sm:$0xff]
        %v235 = vld [vmem:[#allocation5 + $0x68] sm:$0xff]
        %v236 = vld [vmem:[#allocation5 + $0x70] sm:$0xff]
        %v237 = vld [vmem:[#allocation5 + $0x78] sm:$0xff]
        %v238 = vld [vmem:[#allocation7] sm:$0xff]
        %v239 = vld [vmem:[#allocation7 + $0x8] sm:$0xff]
        %240 = vmatprep.subr.mxu0 0.0
        %241 = vmatpush1.msra.mxu0 %v222
        %242 = vmatprep.subr.mxu0 0.0
        %243 = vmatpush1.msra.mxu0 %v223
        %244 = vmatprep.subr.mxu0 0.0
        %245 = vmatpush1.msra.mxu0 %v224
        %246 = vmatprep.subr.mxu0 0.0
        %247 = vmatpush1.msra.mxu0 %v225
        %248 = vmatprep.subr.mxu0 0.0
        %249 = vmatpush1.msra.mxu0 %v226
        %250 = vmatprep.subr.mxu0 0.0
        %251 = vmatpush1.msra.mxu0 %v227
        %252 = vmatprep.subr.mxu0 0.0
        %253 = vmatpush1.msra.mxu0 %v228
        %254 = vmatprep.subr.mxu0 0.0
        %255 = vmatpush1.msra.mxu0 %v229
        %256 = vmatprep.subr.mxu0 0.0
        %257 = vmatpush1.msra.mxu0 %v230
        %258 = vmatprep.subr.mxu0 0.0
        %259 = vmatpush1.msra.mxu0 %v231
        %260 = vmatprep.subr.mxu0 0.0
        %261 = vmatpush1.msra.mxu0 %v232
        %262 = vmatprep.subr.mxu0 0.0
        %263 = vmatpush1.msra.mxu0 %v233
        %264 = vmatprep.subr.mxu0 0.0
        %265 = vmatpush1.msra.mxu0 %v234
        %266 = vmatprep.subr.mxu0 0.0
        %267 = vmatpush1.msra.mxu0 %v235
        %268 = vmatprep.subr.mxu0 0.0
        %269 = vmatpush1.msra.mxu0 %v236
        %270 = vmatprep.subr.mxu0 0.0
        %271 = vmatpush1.msra.mxu0 %v237
        %272 = vmatprep.subr.mxu0 0.0
        %273 = vmatpush1.msra.mxu0 0.0
        %274 = vmatprep.subr.mxu0 0.0
        %275 = vmatpush1.msra.mxu0 0.0
        %276 = vmatprep.subr.mxu0 0.0
        %277 = vmatpush1.msra.mxu0 0.0
        %278 = vmatprep.subr.mxu0 0.0
        %279 = vmatpush1.msra.mxu0 0.0
        %280 = vmatprep.subr.mxu0 0.0
        %281 = vmatpush1.msra.mxu0 0.0
        %282 = vmatprep.subr.mxu0 0.0
        %283 = vmatpush1.msra.mxu0 0.0
        %284 = vmatprep.subr.mxu0 0.0
        %285 = vmatpush1.msra.mxu0 0.0
        %286 = vmatprep.subr.mxu0 0.0
        %287 = vmatpush1.msra.mxu0 0.0
        %288 = vmatprep.subr.mxu0 0.0
        %289 = vmatpush1.msra.mxu0 0.0
        %290 = vmatprep.subr.mxu0 0.0
        %291 = vmatpush1.msra.mxu0 0.0
        %292 = vmatprep.subr.mxu0 0.0
        %293 = vmatpush1.msra.mxu0 0.0
        %294 = vmatprep.subr.mxu0 0.0
        %295 = vmatpush1.msra.mxu0 0.0
        %296 = vmatprep.subr.mxu0 0.0
        %297 = vmatpush1.msra.mxu0 0.0
        %298 = vmatprep.subr.mxu0 0.0
        %299 = vmatpush1.msra.mxu0 0.0
        %300 = vmatprep.subr.mxu0 0.0
        %301 = vmatpush1.msra.mxu0 0.0
        %302 = vmatprep.subr.mxu0 0.0
        %303 = vmatpush1.msra.mxu0 0.0
        %304 = vmatprep.mubr.f32.mxu0 0.0
        %305 = vmatmul.mubr.f32.gmra.mrb[0].mxu0 %v220
        %v306 = vpop.f32.mrb[0].mxu0
        %v307 = vadd.f32 %v238, %v306
        %v308 = vpop.f32.mrb[0].mxu0
        %309 = vmatprep.mubr.f32.mxu0 0.0
        %310 = vmatmul.mubr.f32.gmra.mrb[0].mxu0 %v221
        %v311 = vpop.f32.mrb[0].mxu0
        %v312 = vadd.f32 %v239, %v311
        %v313 = vpop.f32.mrb[0].mxu0
        %314 = vdwg.mxu0
        %315 = vst [vmem:[%s217] sm:$0xff] %v307
        %316 = vst [vmem:[%s217 + $0x8] sm:$0xff] %v312
        %s317 = sand.u32 %s97, 1
        %s318 = scalar_lea.sflag [#allocation4], %s317
        %s319 = sand.u32 %s97, 1
        %s320 = smul.addr %s319, 16
        %s321 = scalar_lea.vmem [#allocation8], %s320
        // Predicated region
        $region45: #{tpu_custom_call.1} parent=31 // pred_check
          %p322 = pneg %p107
        $region46: #{tpu_custom_call.1} parent=31 // pred_check_branch
          %324 = sbr.rel (%p322) target = $region48
        $region47: #{tpu_custom_call.1} parent=31 // pred_region
          %s325 = smul.u32 2, %s21
          %s327 = ssub.s32 256, 256
          %328 = vsyncadd %s318, %s327
          %s329 = smul.addr %s325, 128
          %s330 = scalar_lea.hbm %s3, %s329
          %s331 = sshll.u32 %s321, 4
          %s332 = int_to_ptr.vmem [resolvable:$true] %s331
          %337 = dma.vmem_to_hbm [thread:$0]  %s332, 256, %s330, %s318, 128, 128, 8
        $region48: #{tpu_custom_call.1} parent=31 // pred_fallthru
          _
      $region32: #{tpu_custom_call.1} parent=5 // pred_fallthru
        _
      %p338 = scmp.le.s32.totalorder 2, %s16
      // Predicated region
      $region49: #{tpu_custom_call.1} parent=5 // pred_check
        %p339 = pneg %p338
      $region50: #{tpu_custom_call.1} parent=5 // pred_check_branch
        %341 = sbr.rel (%p339) target = $region52
      $region51: #{tpu_custom_call.1} parent=5 // pred_region
        %s342 = ssub.s32 %s16, 2
        // Predicated region
        $region53: #{tpu_custom_call.1} parent=51 // pred_check
          %p343 = pneg %p113
        $region54: #{tpu_custom_call.1} parent=51 // pred_check_branch
          %345 = sbr.rel (%p343) target = $region56
        $region55: #{tpu_custom_call.1} parent=51 // pred_region
          %s346 = sand.u32 %s98, 1
          %s347 = scalar_lea.sflag [#allocation4], %s346
          %s348 = sand.u32 %s98, 1
          %s349 = smul.addr %s348, 16
          %s350 = scalar_lea.vmem [#allocation8], %s349
          %351 = dma.done %s347, 256
        $region56: #{tpu_custom_call.1} parent=51 // pred_fallthru
          _
      $region52: #{tpu_custom_call.1} parent=5 // pred_fallthru
        _
    $region6: #{tpu_custom_call.1} parent=1 // loop_footer
      %s20 = sadd.s32 1, %s16
    $region7: #{tpu_custom_call.1} parent=1 // loop_footer_branch
      %15 = sbr.rel target = $region3
    $region8: #{tpu_custom_call.1} parent=1 // loop_exit
      _
    %352 = vsyncpa [#allocation3], 1
    %s353 = scalar_lea.sflag [#allocation3], 1
    %354 = vsyncpa %s353, 1
    %355 = vsyncpa [#allocation6], 1
    %356 = vsyncpa [#allocation4], 1
    %s357 = scalar_lea.sflag [#allocation4], 1
    %358 = vsyncpa %s357, 1

</llo_original>
